<compile_context>
chip_gen: v7x
topology: tpu7x:2x2x1
jax: 0.10.0
libtpu: 0.0.40
codegen_flags: <defaults>
</compile_context>

<pallas_src>
import jax
import jax.numpy as jnp
from jax.experimental import pallas as pl
from jax.experimental.pallas import tpu as pltpu


# ---------------------------------------------------------------------------
# Parameter preparation (run ONCE, outside jit).
# PyTorch nn.Linear stores W as [out, in]; we transpose + fuse here so the
# kernel never pays a per-call transpose / concat.
# Fused column order: [ new_hidden (H) | output (O) ].
# ---------------------------------------------------------------------------
def prepare_params(w_hid, b_hid, w_out, b_out, input_size):
    I = input_size
    w_fused = jnp.concatenate([w_hid.T, w_out.T], axis=1)   # [I+H, H+O]
    w_x = w_fused[:I, :]                                    # [I,   H+O]
    w_h = w_fused[I:, :]                                    # [H,   H+O]
    b = jnp.concatenate([b_hid, b_out]).reshape(1, -1)      # [1,   H+O]
    return w_x, w_h, b


# ---------------------------------------------------------------------------
# Single-step fused cell (matches Net.forward exactly).
# ---------------------------------------------------------------------------
def rnn_cell_kernel(x_ref, h_ref, wx_ref, wh_ref, b_ref, fused_ref):
    # Split-K: x @ Wx + hidden @ Wh  ==  concat(x, hidden) @ W, no concat needed.
    acc = jnp.dot(x_ref[...], wx_ref[...], preferred_element_type=jnp.float32)
    acc = acc + jnp.dot(h_ref[...], wh_ref[...],
                        preferred_element_type=jnp.float32)
    fused_ref[...] = (acc + b_ref[...]).astype(fused_ref.dtype)   # [B, H+O]


@jax.jit
def net_forward(x, hidden, w_x, w_h, b):
    """Single RNN cell step -> (output, new_hidden)."""
    B = x.shape[0]
    H = hidden.shape[1]
    HO = w_x.shape[1]

    full = lambda shape: pl.BlockSpec(shape, lambda: (0,) * len(shape),
                                      memory_space=pltpu.VMEM)

    fused = pl.pallas_call(
        rnn_cell_kernel,
        out_shape=jax.ShapeDtypeStruct((B, HO), x.dtype),
        in_specs=[full(x.shape), full(hidden.shape), full(w_x.shape),
                  full(w_h.shape), full(b.shape)],
        out_specs=full((B, HO)),
    )(x, hidden, w_x, w_h, b)

    new_hidden = fused[:, :H]
    output = fused[:, H:]
    return output, new_hidden


# ---------------------------------------------------------------------------
# Sequence version: the time loop lives inside the kernel (grid=(T,)),
# weights are resident across the grid, hidden lives in VMEM scratch.
# ---------------------------------------------------------------------------
def rnn_seq_kernel(x_ref, h0_ref, wx_ref, wh_ref, b_ref, fused_ref, h_scr):
    t = pl.program_id(0)

    @pl.when(t == 0)
    def _():
        h_scr[...] = h0_ref[...]

    H = h_scr.shape[1]
    acc = jnp.dot(x_ref[0], wx_ref[...], preferred_element_type=jnp.float32)
    acc = acc + jnp.dot(h_scr[...], wh_ref[...],
                        preferred_element_type=jnp.float32)
    acc = acc + b_ref[...]
    fused_ref[0] = acc.astype(fused_ref.dtype)        # [B, H+O] for step t
    h_scr[...] = acc[:, :H].astype(h_scr.dtype)       # carry hidden in VMEM


@jax.jit
def net_forward_seq(x_seq, h0, w_x, w_h, b):
    """Run the cell over a whole sequence with ONE pallas_call.

    x_seq: [T, B, I], h0: [B, H] -> (output_seq [T,B,O], hidden_seq [T,B,H])
    """
    T, B, I = x_seq.shape
    H = h0.shape[1]
    HO = w_x.shape[1]

    fused_seq = pl.pallas_call(
        rnn_seq_kernel,
        out_shape=jax.ShapeDtypeStruct((T, B, HO), x_seq.dtype),
        grid=(T,),
        in_specs=[
            pl.BlockSpec((1, B, I), lambda t: (t, 0, 0)),   # per-step x
            pl.BlockSpec((B, H), lambda t: (0, 0)),         # h0 (resident)
            pl.BlockSpec((I, HO), lambda t: (0, 0)),        # weights resident
            pl.BlockSpec((H, HO), lambda t: (0, 0)),
            pl.BlockSpec((1, HO), lambda t: (0, 0)),
        ],
        out_specs=pl.BlockSpec((1, B, HO), lambda t: (t, 0, 0)),
        scratch_shapes=[pltpu.VMEM((B, H), jnp.float32)],
        compiler_params=pltpu.CompilerParams(
            dimension_semantics=("arbitrary",)),            # true recurrence
    )(x_seq, h0, w_x, w_h, b)

    hidden_seq = fused_seq[:, :, :H]
    output_seq = fused_seq[:, :, H:]
    return output_seq, hidden_seq


# ---------------------------------------------------------------------------
# Deterministic init matching nn.Linear (uniform +/- 1/sqrt(fan_in)).
# ---------------------------------------------------------------------------
def init_linear_params(key, in_features, out_features):
    kw, kb = jax.random.split(key)
    bound = 1.0 / jnp.sqrt(float(in_features))
    w = jax.random.uniform(kw, (out_features, in_features),
                           minval=-bound, maxval=bound, dtype=jnp.float32)
    b = jax.random.uniform(kb, (out_features,),
                           minval=-bound, maxval=bound, dtype=jnp.float32)
    return w, b


if __name__ == "__main__":
    B, I, H, O, T = 2, 16, 32, 8, 8

    key = jax.random.PRNGKey(0)
    k_x, k_h, k_hid, k_out, k_seq = jax.random.split(key, 5)

    x = jax.random.normal(k_x, (B, I), dtype=jnp.float32)
    hidden = jax.random.normal(k_h, (B, H), dtype=jnp.float32)
    x_seq = jax.random.normal(k_seq, (T, B, I), dtype=jnp.float32)

    w_hid, b_hid = init_linear_params(k_hid, I + H, H)   # self.hid
    w_out, b_out = init_linear_params(k_out, I + H, O)   # self.out

    # One-time parameter fusion (outside jit -> no per-call transpose/concat).
    w_x, w_h, b = prepare_params(w_hid, b_hid, w_out, b_out, I)

    # --- single-step cell ---------------------------------------------------
    output, new_hidden = net_forward(x, hidden, w_x, w_h, b)
    jax.block_until_ready((output, new_hidden))

    xh = jnp.concatenate([x, hidden], axis=1)
    ref_out = xh @ w_out.T + b_out
    ref_hid = xh @ w_hid.T + b_hid
    assert jnp.allclose(output, ref_out, atol=1e-5, rtol=1e-5)
    assert jnp.allclose(new_hidden, ref_hid, atol=1e-5, rtol=1e-5)

    # --- full-sequence kernel (hidden kept in VMEM across steps) ------------
    h0 = jnp.zeros((B, H), dtype=jnp.float32)            # initHidden()
    out_seq, hid_seq = net_forward_seq(x_seq, h0, w_x, w_h, b)
    jax.block_until_ready((out_seq, hid_seq))

    def ref_step(h, x_t):
        xh_t = jnp.concatenate([x_t, h], axis=1)
        nh = xh_t @ w_hid.T + b_hid
        ot = xh_t @ w_out.T + b_out
        return nh, (ot, nh)

    _, (ref_out_seq, ref_hid_seq) = jax.lax.scan(ref_step, h0, x_seq)
    assert jnp.allclose(out_seq, ref_out_seq, atol=1e-4, rtol=1e-4)
    assert jnp.allclose(hid_seq, ref_hid_seq, atol=1e-4, rtol=1e-4)

    print("KERNEL_OK")
</pallas_src>

<mosaic_0001>
module attributes {stable_mosaic.version = 11 : i64} {
  func.func @rnn_cell_kernel(%arg0: memref<2x16xf32, #tpu.memory_space<vmem>>, %arg1: memref<2x32xf32, #tpu.memory_space<vmem>>, %arg2: memref<16x40xf32, #tpu.memory_space<vmem>>, %arg3: memref<32x40xf32, #tpu.memory_space<vmem>>, %arg4: memref<1x40xf32, #tpu.memory_space<vmem>>, %arg5: memref<2x40xf32, #tpu.memory_space<vmem>>) attributes {dimension_semantics = [], scalar_prefetch = 0 : i64, scratch_operands = 0 : i64, tpu.core_type = #tpu.core_type<tc>} {
    %c0 = arith.constant 0 : index
    %c0_0 = arith.constant 0 : index
    %0 = vector.load %arg0[%c0, %c0_0] : memref<2x16xf32, #tpu.memory_space<vmem>>, vector<2x16xf32>
    %c0_1 = arith.constant 0 : index
    %c0_2 = arith.constant 0 : index
    %1 = vector.load %arg2[%c0_1, %c0_2] : memref<16x40xf32, #tpu.memory_space<vmem>>, vector<16x40xf32>
    %cst = arith.constant dense<0.000000e+00> : vector<2x40xf32>
    %2 = tpu.matmul %0, %1, %cst {dimension_numbers = #tpu.dot_dimension_numbers<[1], [0], [0], [1], [0, 0, 1, 1], [], []>} : vector<2x16xf32>, vector<16x40xf32>, vector<2x40xf32> -> vector<2x40xf32>
    %c0_3 = arith.constant 0 : index
    %c0_4 = arith.constant 0 : index
    %3 = vector.load %arg1[%c0_3, %c0_4] : memref<2x32xf32, #tpu.memory_space<vmem>>, vector<2x32xf32>
    %c0_5 = arith.constant 0 : index
    %c0_6 = arith.constant 0 : index
    %4 = vector.load %arg3[%c0_5, %c0_6] : memref<32x40xf32, #tpu.memory_space<vmem>>, vector<32x40xf32>
    %cst_7 = arith.constant dense<0.000000e+00> : vector<2x40xf32>
    %5 = tpu.matmul %3, %4, %cst_7 {dimension_numbers = #tpu.dot_dimension_numbers<[1], [0], [0], [1], [0, 0, 1, 1], [], []>} : vector<2x32xf32>, vector<32x40xf32>, vector<2x40xf32> -> vector<2x40xf32>
    %6 = arith.addf %2, %5 : vector<2x40xf32>
    %c0_8 = arith.constant 0 : index
    %c0_9 = arith.constant 0 : index
    %7 = vector.load %arg4[%c0_8, %c0_9] : memref<1x40xf32, #tpu.memory_space<vmem>>, vector<1x40xf32>
    %8 = vector.broadcast %7 : vector<1x40xf32> to vector<2x40xf32>
    %9 = arith.addf %6, %8 : vector<2x40xf32>
    %c0_10 = arith.constant 0 : index
    %c0_11 = arith.constant 0 : index
    %10 = vector.load %arg5[%c0_10, %c0_11] : memref<2x40xf32, #tpu.memory_space<vmem>>, vector<2x40xf32>
    tpu.vector_store %arg5[%c0_10, %c0_11], %9 {strides = array<i32>} : memref<2x40xf32, #tpu.memory_space<vmem>>, vector<2x40xf32>,
    return
  }
}

</mosaic_0001>

<llo_original>
// kernel: net_forward.1
$region0: #{net_forward.1}
  #allocation0 [shape = 'u32[]', space=smem, size = 0x4, offset = 0x4, fixed_abs, tag = 'smem constant byte address 0x4 - core index']
  #allocation1 [shape = 'u32[144,128]{1,0:T(1,128)}', space=vmem, size = 0x12000, scoped, tag = 'internal scratch']
  %s0 = inlined_call_operand.hbm [shape: f32[2,16], index: 0, kind: input, shape index: {}]
  %s1 = inlined_call_operand.vmem [shape: f32[2,32], index: 1, kind: input, shape index: {}]
  %s2 = inlined_call_operand.hbm [shape: f32[16,40], index: 2, kind: input, shape index: {}]
  %s3 = inlined_call_operand.hbm [shape: f32[32,40], index: 3, kind: input, shape index: {}]
  %s4 = inlined_call_operand.vmem [shape: f32[1,40], index: 4, kind: input, shape index: {}]
  %s5 = inlined_call_operand.vmem [shape: f32[2,40], index: 5, kind: output, shape index: {}]
  %s6 = sld [smem:[#allocation0]]
  $region42: #{net_forward.1} parent=0
    _
  %s8 = ssub.s32 1, %s6
  %s9 = scalar_select 0, %s8, %s6
  $region1: #{net_forward.1} parent=0
    #allocation2 [shape = 'u8[1024]{0}', space=vmem, size = 0x400, scoped, tag = 'input window, operand 0, single buffered']
    #allocation3 [shape = 's32[1]{0}', space=sflag, size = 0x4, scoped, tag = 'scoped memory for net_forward.1']
    #allocation4 [shape = 'u8[8192]{0}', space=vmem, size = 0x2000, scoped, tag = 'input window, operand 2, single buffered']
    #allocation5 [shape = 's32[1]{0}', space=sflag, size = 0x4, scoped, tag = 'scoped memory for net_forward.1']
    #allocation6 [shape = 'u8[16384]{0}', space=vmem, size = 0x4000, scoped, tag = 'input window, operand 3, single buffered']
    %10 = vsyncpa [#allocation3], 0
    %11 = vsyncpa [#allocation5], 0
    // Predicated region
    $region2: #{net_forward.1} parent=1 // pred_check
      _
    $region3: #{net_forward.1} parent=1 // pred_check_branch
      %13 = sbr.rel (0) target = $region5
    $region4: #{net_forward.1} parent=1 // pred_region
      %s15 = ssub.s32 32, 32
      %16 = vsyncadd [#allocation3], %s15
      %s18 = sshll.u32 [#allocation2], 4
      %s19 = int_to_ptr.vmem [resolvable:$true] %s18
      %21 = dma.hbm_to_vmem [thread:$0]  %s0, 32, %s19, [#allocation3]
    $region5: #{net_forward.1} parent=1 // pred_fallthru
      _
    // Predicated region
    $region6: #{net_forward.1} parent=1 // pred_check
      _
    $region7: #{net_forward.1} parent=1 // pred_check_branch
      %23 = sbr.rel (0) target = $region9
    $region8: #{net_forward.1} parent=1 // pred_region
      _
    $region9: #{net_forward.1} parent=1 // pred_fallthru
      _
    // Predicated region
    $region10: #{net_forward.1} parent=1 // pred_check
      _
    $region11: #{net_forward.1} parent=1 // pred_check_branch
      %25 = sbr.rel (0) target = $region13
    $region12: #{net_forward.1} parent=1 // pred_region
      %s27 = ssub.s32 256, 256
      %28 = vsyncadd [#allocation5], %s27
      %s29 = sshll.u32 [#allocation4], 4
      %s30 = int_to_ptr.vmem [resolvable:$true] %s29
      %35 = dma.hbm_to_vmem [thread:$0]  %s2, 256, %s30, [#allocation5], 128, 128, 8
    $region13: #{net_forward.1} parent=1 // pred_fallthru
      _
    // Predicated region
    $region14: #{net_forward.1} parent=1 // pred_check
      _
    $region15: #{net_forward.1} parent=1 // pred_check_branch
      %37 = sbr.rel (0) target = $region17
    $region16: #{net_forward.1} parent=1 // pred_region
      %s39 = ssub.s32 512, 512
      %40 = vsyncadd [#allocation5], %s39
      %s41 = sshll.u32 [#allocation6], 4
      %s42 = int_to_ptr.vmem [resolvable:$true] %s41
      %47 = dma.hbm_to_vmem [thread:$0]  %s3, 512, %s42, [#allocation5], 128, 128, 8
    $region17: #{net_forward.1} parent=1 // pred_fallthru
      _
    // Predicated region
    $region18: #{net_forward.1} parent=1 // pred_check
      _
    $region19: #{net_forward.1} parent=1 // pred_check_branch
      %49 = sbr.rel (0) target = $region21
    $region20: #{net_forward.1} parent=1 // pred_region
      _
    $region21: #{net_forward.1} parent=1 // pred_fallthru
      _
    // Predicated region
    $region22: #{net_forward.1} parent=1 // pred_check
      _
    $region23: #{net_forward.1} parent=1 // pred_check_branch
      %51 = sbr.rel (0) target = $region25
    $region24: #{net_forward.1} parent=1 // pred_region
      %52 = dma.done [#allocation3], 32
    $region25: #{net_forward.1} parent=1 // pred_fallthru
      _
    // Predicated region
    $region26: #{net_forward.1} parent=1 // pred_check
      _
    $region27: #{net_forward.1} parent=1 // pred_check_branch
      %54 = sbr.rel (0) target = $region29
    $region28: #{net_forward.1} parent=1 // pred_region
      %55 = dma.done [#allocation5], 256
    $region29: #{net_forward.1} parent=1 // pred_fallthru
      _
    // Predicated region
    $region30: #{net_forward.1} parent=1 // pred_check
      _
    $region31: #{net_forward.1} parent=1 // pred_check_branch
      %57 = sbr.rel (0) target = $region33
    $region32: #{net_forward.1} parent=1 // pred_region
      %58 = dma.done [#allocation5], 512
    $region33: #{net_forward.1} parent=1 // pred_fallthru
      _
    %v59 = vld [vmem:[#allocation2] sm:$0x3]
    %v60 = vld [vmem:[#allocation4] sm:$0xff]
    %v61 = vld [vmem:[#allocation4 + $0x8] sm:$0xff]
    %v62 = vld [vmem:[%s1] sm:$0x3]
    %v63 = vld [vmem:[#allocation6] sm:$0xff]
    %v64 = vld [vmem:[#allocation6 + $0x8] sm:$0xff]
    %v65 = vld [vmem:[#allocation6 + $0x10] sm:$0xff]
    %v66 = vld [vmem:[#allocation6 + $0x18] sm:$0xff]
    %vm67 = vcmask 261120
    %v69 = vsel %vm67, %v62, 0
    %71 = vmatprep.subr.mxu0 0.0
    %72 = vmatpush1.msra.mxu0 %v63
    %73 = vmatprep.subr.mxu0 0.0
    %74 = vmatpush1.msra.mxu0 %v64
    %75 = vmatprep.subr.mxu0 0.0
    %76 = vmatpush1.msra.mxu0 %v65
    %77 = vmatprep.subr.mxu0 0.0
    %78 = vmatpush1.msra.mxu0 %v66
    %79 = vmatprep.subr.mxu0 0.0
    %80 = vmatpush1.msra.mxu0 0.0
    %81 = vmatprep.subr.mxu0 0.0
    %82 = vmatpush1.msra.mxu0 0.0
    %83 = vmatprep.subr.mxu0 0.0
    %84 = vmatpush1.msra.mxu0 0.0
    %85 = vmatprep.subr.mxu0 0.0
    %86 = vmatpush1.msra.mxu0 0.0
    %87 = vmatprep.subr.mxu0 0.0
    %88 = vmatpush1.msra.mxu0 0.0
    %89 = vmatprep.subr.mxu0 0.0
    %90 = vmatpush1.msra.mxu0 0.0
    %91 = vmatprep.subr.mxu0 0.0
    %92 = vmatpush1.msra.mxu0 0.0
    %93 = vmatprep.subr.mxu0 0.0
    %94 = vmatpush1.msra.mxu0 0.0
    %95 = vmatprep.subr.mxu0 0.0
    %96 = vmatpush1.msra.mxu0 0.0
    %97 = vmatprep.subr.mxu0 0.0
    %98 = vmatpush1.msra.mxu0 0.0
    %99 = vmatprep.subr.mxu0 0.0
    %100 = vmatpush1.msra.mxu0 0.0
    %101 = vmatprep.subr.mxu0 0.0
    %102 = vmatpush1.msra.mxu0 0.0
    %103 = vmatprep.subr.mxu0 0.0
    %104 = vmatpush1.msra.mxu0 0.0
    %105 = vmatprep.subr.mxu0 0.0
    %106 = vmatpush1.msra.mxu0 0.0
    %107 = vmatprep.subr.mxu0 0.0
    %108 = vmatpush1.msra.mxu0 0.0
    %109 = vmatprep.subr.mxu0 0.0
    %110 = vmatpush1.msra.mxu0 0.0
    %111 = vmatprep.subr.mxu0 0.0
    %112 = vmatpush1.msra.mxu0 0.0
    %113 = vmatprep.subr.mxu0 0.0
    %114 = vmatpush1.msra.mxu0 0.0
    %115 = vmatprep.subr.mxu0 0.0
    %116 = vmatpush1.msra.mxu0 0.0
    %117 = vmatprep.subr.mxu0 0.0
    %118 = vmatpush1.msra.mxu0 0.0
    %119 = vmatprep.subr.mxu0 0.0
    %120 = vmatpush1.msra.mxu0 0.0
    %121 = vmatprep.subr.mxu0 0.0
    %122 = vmatpush1.msra.mxu0 0.0
    %123 = vmatprep.subr.mxu0 0.0
    %124 = vmatpush1.msra.mxu0 0.0
    %125 = vmatprep.subr.mxu0 0.0
    %126 = vmatpush1.msra.mxu0 0.0
    %127 = vmatprep.subr.mxu0 0.0
    %128 = vmatpush1.msra.mxu0 0.0
    %129 = vmatprep.subr.mxu0 0.0
    %130 = vmatpush1.msra.mxu0 0.0
    %131 = vmatprep.subr.mxu0 0.0
    %132 = vmatpush1.msra.mxu0 0.0
    %133 = vmatprep.subr.mxu0 0.0
    %134 = vmatpush1.msra.mxu0 0.0
    %135 = vmatprep.mubr.f32.mxu0 0.0
    %136 = vmatmul.mubr.f32.gmra.mrb[0].mxu0 %v69
    %v137 = vpop.f32.mrb[0].mxu0
    %v138 = vadd.f32 0.0, %v137
    %v139 = vpop.f32.mrb[0].mxu0
    %140 = vdwg.mxu0
    %vm141 = vcmask 130048
    %v143 = vsel %vm141, %v59, 0
    %145 = vmatprep.subr.mxu0 0.0
    %146 = vmatpush1.msra.mxu0 %v60
    %147 = vmatprep.subr.mxu0 0.0
    %148 = vmatpush1.msra.mxu0 %v61
    %149 = vmatprep.subr.mxu0 0.0
    %150 = vmatpush1.msra.mxu0 0.0
    %151 = vmatprep.subr.mxu0 0.0
    %152 = vmatpush1.msra.mxu0 0.0
    %153 = vmatprep.subr.mxu0 0.0
    %154 = vmatpush1.msra.mxu0 0.0
    %155 = vmatprep.subr.mxu0 0.0
    %156 = vmatpush1.msra.mxu0 0.0
    %157 = vmatprep.subr.mxu0 0.0
    %158 = vmatpush1.msra.mxu0 0.0
    %159 = vmatprep.subr.mxu0 0.0
    %160 = vmatpush1.msra.mxu0 0.0
    %161 = vmatprep.subr.mxu0 0.0
    %162 = vmatpush1.msra.mxu0 0.0
    %163 = vmatprep.subr.mxu0 0.0
    %164 = vmatpush1.msra.mxu0 0.0
    %165 = vmatprep.subr.mxu0 0.0
    %166 = vmatpush1.msra.mxu0 0.0
    %167 = vmatprep.subr.mxu0 0.0
    %168 = vmatpush1.msra.mxu0 0.0
    %169 = vmatprep.subr.mxu0 0.0
    %170 = vmatpush1.msra.mxu0 0.0
    %171 = vmatprep.subr.mxu0 0.0
    %172 = vmatpush1.msra.mxu0 0.0
    %173 = vmatprep.subr.mxu0 0.0
    %174 = vmatpush1.msra.mxu0 0.0
    %175 = vmatprep.subr.mxu0 0.0
    %176 = vmatpush1.msra.mxu0 0.0
    %177 = vmatprep.subr.mxu0 0.0
    %178 = vmatpush1.msra.mxu0 0.0
    %179 = vmatprep.subr.mxu0 0.0
    %180 = vmatpush1.msra.mxu0 0.0
    %181 = vmatprep.subr.mxu0 0.0
    %182 = vmatpush1.msra.mxu0 0.0
    %183 = vmatprep.subr.mxu0 0.0
    %184 = vmatpush1.msra.mxu0 0.0
    %185 = vmatprep.subr.mxu0 0.0
    %186 = vmatpush1.msra.mxu0 0.0
    %187 = vmatprep.subr.mxu0 0.0
    %188 = vmatpush1.msra.mxu0 0.0
    %189 = vmatprep.subr.mxu0 0.0
    %190 = vmatpush1.msra.mxu0 0.0
    %191 = vmatprep.subr.mxu0 0.0
    %192 = vmatpush1.msra.mxu0 0.0
    %193 = vmatprep.subr.mxu0 0.0
    %194 = vmatpush1.msra.mxu0 0.0
    %195 = vmatprep.subr.mxu0 0.0
    %196 = vmatpush1.msra.mxu0 0.0
    %197 = vmatprep.subr.mxu0 0.0
    %198 = vmatpush1.msra.mxu0 0.0
    %199 = vmatprep.subr.mxu0 0.0
    %200 = vmatpush1.msra.mxu0 0.0
    %201 = vmatprep.subr.mxu0 0.0
    %202 = vmatpush1.msra.mxu0 0.0
    %203 = vmatprep.subr.mxu0 0.0
    %204 = vmatpush1.msra.mxu0 0.0
    %205 = vmatprep.subr.mxu0 0.0
    %206 = vmatpush1.msra.mxu0 0.0
    %207 = vmatprep.subr.mxu0 0.0
    %208 = vmatpush1.msra.mxu0 0.0
    %209 = vmatprep.mubr.f32.mxu0 0.0
    %210 = vmatmul.mubr.f32.gmra.mrb[0].mxu0 %v143
    %v211 = vpop.f32.mrb[0].mxu0
    %v212 = vadd.f32 %v138, %v211
    %v213 = vpop.f32.mrb[0].mxu0
    %214 = vdwg.mxu0
    %v215 = vld [vmem:[%s4] sm:$0x1]
    %v217 = vlaneseq
    %v218 = vshrl.u32 %v217, 7
    %v219 = vsub.s32 0, %v218
    %v220 = vrot.slane %v215, %v219
    %v222 = vadd.f32 %v212, %v220
    %vm223 = vcmask 320512
    %224 = vst.msk [vmem:[%s5] sm:$0x3] %vm223, %v222
    // Predicated region
    $region34: #{net_forward.1} parent=1 // pred_check
      _
    $region35: #{net_forward.1} parent=1 // pred_check_branch
      %226 = sbr.rel (0) target = $region37
    $region36: #{net_forward.1} parent=1 // pred_region
      _
    $region37: #{net_forward.1} parent=1 // pred_fallthru
      _
    // Predicated region
    $region38: #{net_forward.1} parent=1 // pred_check
      _
    $region39: #{net_forward.1} parent=1 // pred_check_branch
      %228 = sbr.rel (0) target = $region41
    $region40: #{net_forward.1} parent=1 // pred_region
      _
    $region41: #{net_forward.1} parent=1 // pred_fallthru
      _
    %229 = vsyncpa [#allocation3], 1
    %230 = vsyncpa [#allocation5], 1

</llo_original>
